<compile_context>
chip_gen: v5e
topology: v5e:2x2
jax: 0.10.0
libtpu: 0.0.40
codegen_flags: <defaults>
</compile_context>

<pallas_src>
import functools

import jax
import jax.numpy as jnp
from jax import lax
from jax.experimental import pallas as pl
from jax.experimental.pallas import tpu as pltpu

EPS = 1e-5
MOMENTUM = 0.9


# ----------------------------------------------------------------------------
# generation-aware configuration
# ----------------------------------------------------------------------------
def _physical_vmem_bytes():
    try:
        info = pltpu.get_tpu_info()
        for attr in ("vmem_capacity_bytes", "vmem_bytes", "vmem_size_bytes"):
            v = getattr(info, attr, None)
            if isinstance(v, int) and v > 0:
                return v
    except Exception:
        pass
    return 64 << 20  # conservative fallback (v7x per-TC VMEM)


@functools.lru_cache(maxsize=None)
def _device_config():
    phys = _physical_vmem_bytes()
    if phys >= (128 << 20):
        # v5e / v6e: 128 MiB physical VMEM
        return dict(vmem_limit=96 << 20, fused_vmem_limit=96 << 20,
                    tile_bytes=8 << 20, fast_bytes=24 << 20)
    # v7x: 64 MiB physical VMEM per TensorCore
    return dict(vmem_limit=44 << 20, fused_vmem_limit=48 << 20,
                tile_bytes=6 << 20, fast_bytes=12 << 20)


# ----------------------------------------------------------------------------
# helpers
# ----------------------------------------------------------------------------
def _pick_tile(dim, max_tile, align):
    """Largest multiple of `align` that divides `dim` and is <= max_tile,
    falling back to the full dim (full dims are always legal block sizes)."""
    if dim <= max_tile:
        return dim
    t = (max_tile // align) * align
    while t >= align:
        if dim % t == 0:
            return t
        t -= align
    return dim


def _pick_leading_tile(dim, cap):
    """Largest divisor of `dim` that is <= cap (leading dims: no (8,128) rule)."""
    for t in range(min(dim, max(1, cap)), 0, -1):
        if dim % t == 0:
            return t
    return 1


def _sublane_align(dtype):
    """Sub-32-bit dtypes pack along sublanes: 8 rows (f32), 16 (bf16), 32 (i8)."""
    return max(8, 32 // max(1, jnp.dtype(dtype).itemsize))


# ----------------------------------------------------------------------------
# 4D (N, C, L) kernels, L = H*W on the lane axis, C on sublanes
# ----------------------------------------------------------------------------
def _bn4d_stats_kernel(x_ref, sum_ref, ssq_ref):
    """Per-(N-block, channel) partial sums; accumulate over the L grid axis."""
    @pl.when(pl.program_id(2) == 0)
    def _():
        sum_ref[...] = jnp.zeros_like(sum_ref)
        ssq_ref[...] = jnp.zeros_like(ssq_ref)

    x = x_ref[...].astype(jnp.float32)                                # (TN, TC, TL)
    s1 = jnp.sum(jnp.sum(x, axis=2, keepdims=True), axis=0, keepdims=True)
    s2 = jnp.sum(jnp.sum(x * x, axis=2, keepdims=True), axis=0, keepdims=True)
    sum_ref[...] += s1                                                # (1, TC, 1)
    ssq_ref[...] += s2


def _bn4d_norm_kernel(x_ref, scale_ref, shift_ref, y_ref):
    x = x_ref[...].astype(jnp.float32)                                # (TN, TC, TL)
    scale = scale_ref[...]                                            # (TC, 1)
    shift = shift_ref[...]
    y_ref[...] = (x * scale[None, :, :] + shift[None, :, :]).astype(y_ref.dtype)


def _bn4d_fused_kernel(x_ref, gamma_ref, beta_ref, y_ref, mean_ref, var_ref):
    """Small-tensor fast path: whole (N, C, L) block resident, single x read."""
    x = x_ref[...].astype(jnp.float32)                                # (N, C, L)
    n_elem = x.shape[0] * x.shape[2]
    s1 = jnp.sum(jnp.sum(x, axis=2, keepdims=True), axis=0)           # (C, 1)
    s2 = jnp.sum(jnp.sum(x * x, axis=2, keepdims=True), axis=0)       # (C, 1)
    mean = s1 / n_elem
    var = jnp.maximum(s2 / n_elem - mean * mean, 0.0)
    inv_std = lax.rsqrt(var + EPS)
    scale = gamma_ref[...] * inv_std                                  # (C, 1)
    shift = beta_ref[...] - mean * scale
    y_ref[...] = (x * scale[None, :, :] + shift[None, :, :]).astype(y_ref.dtype)
    mean_ref[...] = mean
    var_ref[...] = var


def _bn4d_fused(x3, gamma_c1, beta_c1, cfg):
    N, C, L = x3.shape
    full = lambda shape: pl.BlockSpec(shape, lambda s=tuple(shape): tuple(0 for _ in s))
    y3, mean, var = pl.pallas_call(
        _bn4d_fused_kernel,
        out_shape=(
            jax.ShapeDtypeStruct((N, C, L), x3.dtype),
            jax.ShapeDtypeStruct((C, 1), jnp.float32),
            jax.ShapeDtypeStruct((C, 1), jnp.float32),
        ),
        grid=(),
        in_specs=[full((N, C, L)), full((C, 1)), full((C, 1))],
        out_specs=(full((N, C, L)), full((C, 1)), full((C, 1))),
        compiler_params=pltpu.CompilerParams(vmem_limit_bytes=cfg["fused_vmem_limit"]),
    )(x3, gamma_c1, beta_c1)
    return y3, mean, var


def _bn4d_tiled(x3, gamma_c1, beta_c1, cfg, *, max_tl=2048, max_tc=256):
    """Two-pass streaming batch norm over (N, C, L)."""
    N, C, L0 = x3.shape
    dtype = x3.dtype
    itemsize = jnp.dtype(dtype).itemsize
    align_c = _sublane_align(dtype)
    tile_bytes = cfg["tile_bytes"]
    vmem_limit = cfg["vmem_limit"]

    # Lane tile: multiple of 128 (or full L).  If L has no 128-aligned divisor
    # <= max_tl, pad with zeros to the next multiple of 128 (exact for sums).
    tl = _pick_tile(L0, max_tl, 128)
    L = L0
    if L0 > max_tl and tl == L0:
        L = ((L0 + 127) // 128) * 128
        x3 = jnp.pad(x3, ((0, 0), (0, 0), (0, L - L0)))
        tl = _pick_tile(L, max_tl, 128)

    # Channel tile: dtype-aware alignment; cap at C//2 when possible so the C
    # grid axis has >= 2 blocks -> v7x megacore can shard the stats pass.
    if C >= 2 * align_c:
        tc = _pick_tile(C, min(max_tc, C // 2), align_c)
    else:
        tc = _pick_tile(C, max_tc, align_c)

    tn = _pick_leading_tile(N, max(1, tile_bytes // max(1, tc * tl * itemsize)))
    nb, cb, lb = N // tn, C // tc, L // tl
    grid = (nb, cb, lb)

    x_spec = pl.BlockSpec((tn, tc, tl), lambda n, c, l: (n, c, l))
    part_spec = pl.BlockSpec((1, tc, 1), lambda n, c, l: (n, c, 0))
    vec_spec = pl.BlockSpec((tc, 1), lambda n, c, l: (c, 0))

    # Pass 1: per-(N-block, channel) partial sum / sum-of-squares.
    s1p, s2p = pl.pallas_call(
        _bn4d_stats_kernel,
        out_shape=(
            jax.ShapeDtypeStruct((nb, C, 1), jnp.float32),
            jax.ShapeDtypeStruct((nb, C, 1), jnp.float32),
        ),
        grid=grid,
        in_specs=[x_spec],
        out_specs=(part_spec, part_spec),
        compiler_params=pltpu.CompilerParams(
            dimension_semantics=("parallel", "parallel", "arbitrary"),
            vmem_limit_bytes=vmem_limit),
    )(x3)

    # Tiny (C,)-sized math in plain JAX: reduce partials and fold stats +
    # affine params into per-channel scale/shift for the normalize pass.
    count = float(N * L0)
    s1 = jnp.sum(s1p, axis=0)                                         # (C, 1)
    s2 = jnp.sum(s2p, axis=0)
    mean = s1 / count
    var = jnp.maximum(s2 / count - mean * mean, 0.0)
    inv_std = lax.rsqrt(var + EPS)
    scale = gamma_c1 * inv_std
    shift = beta_c1 - mean * scale

    # Pass 2: y = x * scale + shift, every tile independent -> all parallel.
    y3 = pl.pallas_call(
        _bn4d_norm_kernel,
        out_shape=jax.ShapeDtypeStruct((N, C, L), dtype),
        grid=grid,
        in_specs=[x_spec, vec_spec, vec_spec],
        out_specs=x_spec,
        compiler_params=pltpu.CompilerParams(
            dimension_semantics=("parallel", "parallel", "parallel"),
            vmem_limit_bytes=vmem_limit),
    )(x3, scale, shift)

    if L != L0:
        y3 = y3[:, :, :L0]
    return y3, mean, var


# ----------------------------------------------------------------------------
# 2D (N, C) kernels, C on the lane axis
# ----------------------------------------------------------------------------
def _bn2d_stats_kernel(x_ref, sum_ref, ssq_ref):
    x = x_ref[...].astype(jnp.float32)                                # (TN, C)
    sum_ref[...] = jnp.sum(x, axis=0, keepdims=True).reshape(1, 1, -1)
    ssq_ref[...] = jnp.sum(x * x, axis=0, keepdims=True).reshape(1, 1, -1)


def _bn2d_norm_kernel(x_ref, scale_ref, shift_ref, y_ref):
    x = x_ref[...].astype(jnp.float32)
    y_ref[...] = (x * scale_ref[...] + shift_ref[...]).astype(y_ref.dtype)


def _bn2d_fused_kernel(x_ref, gamma_ref, beta_ref, y_ref, mean_ref, var_ref):
    x = x_ref[...].astype(jnp.float32)                                # (N, C)
    n = x.shape[0]
    s1 = jnp.sum(x, axis=0, keepdims=True)
    s2 = jnp.sum(x * x, axis=0, keepdims=True)
    mean = s1 / n
    var = jnp.maximum(s2 / n - mean * mean, 0.0)
    inv_std = lax.rsqrt(var + EPS)
    scale = gamma_ref[...] * inv_std
    shift = beta_ref[...] - mean * scale
    y_ref[...] = (x * scale + shift).astype(y_ref.dtype)
    mean_ref[...] = mean
    var_ref[...] = var


def _bn2d_fused(x, gamma_1c, beta_1c, cfg):
    N, C = x.shape
    full = lambda shape: pl.BlockSpec(shape, lambda s=tuple(shape): tuple(0 for _ in s))
    return pl.pallas_call(
        _bn2d_fused_kernel,
        out_shape=(
            jax.ShapeDtypeStruct((N, C), x.dtype),
            jax.ShapeDtypeStruct((1, C), jnp.float32),
            jax.ShapeDtypeStruct((1, C), jnp.float32),
        ),
        grid=(),
        in_specs=[full((N, C)), full((1, C)), full((1, C))],
        out_specs=(full((N, C)), full((1, C)), full((1, C))),
        compiler_params=pltpu.CompilerParams(vmem_limit_bytes=cfg["fused_vmem_limit"]),
    )(x, gamma_1c, beta_1c)


def _bn2d_tiled(x, gamma_1c, beta_1c, cfg):
    N, C = x.shape
    itemsize = jnp.dtype(x.dtype).itemsize
    align_n = _sublane_align(x.dtype)
    tn = _pick_tile(N, max(align_n, cfg["tile_bytes"] // max(1, C * itemsize)), align_n)
    nb = N // tn
    grid = (nb,)

    x_spec = pl.BlockSpec((tn, C), lambda i: (i, 0))
    part_spec = pl.BlockSpec((1, 1, C), lambda i: (i, 0, 0))
    vec_spec = pl.BlockSpec((1, C), lambda i: (0, 0))

    # Pass 1: per-N-block partial sums (each block written once -> fully parallel).
    s1p, s2p = pl.pallas_call(
        _bn2d_stats_kernel,
        out_shape=(
            jax.ShapeDtypeStruct((nb, 1, C), jnp.float32),
            jax.ShapeDtypeStruct((nb, 1, C), jnp.float32),
        ),
        grid=grid,
        in_specs=[x_spec],
        out_specs=(part_spec, part_spec),
        compiler_params=pltpu.CompilerParams(
            dimension_semantics=("parallel",), vmem_limit_bytes=cfg["vmem_limit"]),
    )(x)

    s1 = jnp.sum(s1p, axis=0)                                         # (1, C)
    s2 = jnp.sum(s2p, axis=0)
    mean = s1 / float(N)
    var = jnp.maximum(s2 / float(N) - mean * mean, 0.0)
    inv_std = lax.rsqrt(var + EPS)
    scale = gamma_1c * inv_std
    shift = beta_1c - mean * scale

    y = pl.pallas_call(
        _bn2d_norm_kernel,
        out_shape=jax.ShapeDtypeStruct((N, C), x.dtype),
        grid=grid,
        in_specs=[x_spec, vec_spec, vec_spec],
        out_specs=x_spec,
        compiler_params=pltpu.CompilerParams(
            dimension_semantics=("parallel",), vmem_limit_bytes=cfg["vmem_limit"]),
    )(x, scale, shift)
    return y, mean, var


def _bn2d(x, gamma_1c, beta_1c, cfg):
    N, C = x.shape
    if N * C * jnp.dtype(x.dtype).itemsize <= cfg["fast_bytes"]:
        return _bn2d_fused(x, gamma_1c, beta_1c, cfg)
    return _bn2d_tiled(x, gamma_1c, beta_1c, cfg)


# ----------------------------------------------------------------------------
# Module wrapper (mirrors the PyTorch BatchNorm module, training branch)
# ----------------------------------------------------------------------------
class BatchNormPallas:
    def __init__(self, num_features, num_dims):
        assert num_dims in (2, 4)
        self.num_features = num_features
        self.num_dims = num_dims
        shape = (1, num_features) if num_dims == 2 else (1, num_features, 1, 1)
        self.param_shape = shape
        self.gamma = jnp.ones(shape, jnp.float32)
        self.beta = jnp.zeros(shape, jnp.float32)
        self.moving_mean = jnp.zeros(shape, jnp.float32)
        self.moving_var = jnp.ones(shape, jnp.float32)

    def __call__(self, x):
        cfg = _device_config()
        C = self.num_features
        itemsize = jnp.dtype(x.dtype).itemsize
        if self.num_dims == 4:
            N, Cx, H, W = x.shape
            assert Cx == C
            L = H * W
            # Small-spatial fallback: keep stores lane-dense by putting channels
            # on the lane axis (one transpose each way, paid back by the
            # store-dominated normalize pass).
            channels_last = (L < 128) or (L % 128 != 0 and C >= 128)
            if channels_last:
                x2 = jnp.transpose(x, (0, 2, 3, 1)).reshape(N * L, C)
                y2, mean, var = _bn2d(x2, self.gamma.reshape(1, C),
                                      self.beta.reshape(1, C), cfg)
                y = jnp.transpose(y2.reshape(N, H, W, C), (0, 3, 1, 2))
            else:
                x3 = x.reshape(N, C, L)            # free reshape in NCHW layout
                g = self.gamma.reshape(C, 1)
                b = self.beta.reshape(C, 1)
                if x3.size * itemsize <= cfg["fast_bytes"]:
                    y3, mean, var = _bn4d_fused(x3, g, b, cfg)
                else:
                    y3, mean, var = _bn4d_tiled(x3, g, b, cfg)
                y = y3.reshape(N, C, H, W)
        else:
            N, Cx = x.shape
            assert Cx == C
            y, mean, var = _bn2d(x, self.gamma.reshape(1, C),
                                 self.beta.reshape(1, C), cfg)

        mean_p = mean.reshape(self.param_shape)
        var_p = var.reshape(self.param_shape)
        self.moving_mean = MOMENTUM * self.moving_mean + (1.0 - MOMENTUM) * mean_p
        self.moving_var = MOMENTUM * self.moving_var + (1.0 - MOMENTUM) * var_p
        return y


# ----------------------------------------------------------------------------
# Pure-JAX references (torch formula: two-pass, biased variance)
# ----------------------------------------------------------------------------
def _reference_bn4d(x, gamma, beta, mm, mv, eps, momentum):
    mean = jnp.mean(x, axis=(0, 2, 3), keepdims=True)
    var = jnp.mean((x - mean) ** 2, axis=(0, 2, 3), keepdims=True)
    y = gamma * (x - mean) / jnp.sqrt(var + eps) + beta
    return y, momentum * mm + (1 - momentum) * mean, momentum * mv + (1 - momentum) * var


def _reference_bn2d(x, gamma, beta, mm, mv, eps, momentum):
    mean = jnp.mean(x, axis=0, keepdims=True)
    var = jnp.mean((x - mean) ** 2, axis=0, keepdims=True)
    y = gamma * (x - mean) / jnp.sqrt(var + eps) + beta
    return y, momentum * mm + (1 - momentum) * mean, momentum * mv + (1 - momentum) * var


if __name__ == "__main__":
    key = jax.random.PRNGKey(0)
    k1, k2, k3, k4, k5, k6 = jax.random.split(key, 6)
    TOL = dict(atol=1e-4, rtol=1e-4)
    ones4 = lambda c: jnp.ones((1, c, 1, 1))
    zeros4 = lambda c: jnp.zeros((1, c, 1, 1))

    # Tiny cfg used to force the tiled paths / multi-step grids in tests.
    tiny_cfg = dict(vmem_limit=32 << 20, fused_vmem_limit=32 << 20,
                    tile_bytes=8 * 128 * 4, fast_bytes=0)

    # ---- 4D conv case, small shape (fused fast path) ------------------------
    N, C, H, W = 2, 4, 16, 16
    x = jax.random.normal(k1, (N, C, H, W), jnp.float32) * 2.0 + 0.5
    bn = BatchNormPallas(num_features=C, num_dims=4)
    y = jax.block_until_ready(bn(x))
    y_ref, mm_ref, mv_ref = _reference_bn4d(
        x, ones4(C), zeros4(C), zeros4(C), ones4(C), EPS, MOMENTUM)
    assert jnp.allclose(y, y_ref, **TOL)
    assert jnp.allclose(bn.moving_mean, mm_ref, **TOL)
    assert jnp.allclose(bn.moving_var, mv_ref, **TOL)

    # ---- 4D conv case, forced tiled two-pass path (grid 4x2x2) --------------
    N2, C2, H2, W2 = 4, 16, 16, 16
    x2 = jax.random.normal(k2, (N2, C2, H2, W2), jnp.float32) * 1.5 - 0.3
    x2_3 = x2.reshape(N2, C2, H2 * W2)
    g2 = jnp.full((C2, 1), 1.25, jnp.float32)
    b2 = jnp.full((C2, 1), -0.5, jnp.float32)
    y2_3, mean2, var2 = _bn4d_tiled(x2_3, g2, b2, tiny_cfg, max_tl=128, max_tc=8)
    y2_3 = jax.block_until_ready(y2_3)
    m_ref = jnp.mean(x2_3, axis=(0, 2)).reshape(C2, 1)
    v_ref = jnp.mean((x2_3 - m_ref[None, :, :]) ** 2, axis=(0, 2)).reshape(C2, 1)
    y2_ref = (g2[None, :, :] * (x2_3 - m_ref[None, :, :])
              / jnp.sqrt(v_ref[None, :, :] + EPS) + b2[None, :, :])
    assert jnp.allclose(y2_3, y2_ref, **TOL)
    assert jnp.allclose(mean2, m_ref, **TOL)
    assert jnp.allclose(var2, v_ref, **TOL)

    # ---- 4D tiled path with L padded to a multiple of 128 -------------------
    Np, Cp, Lp = 2, 8, 200
    xp = jax.random.normal(k3, (Np, Cp, Lp), jnp.float32) * 0.7 + 0.2
    gp = jnp.full((Cp, 1), 0.8, jnp.float32)
    bp = jnp.full((Cp, 1), 0.1, jnp.float32)
    yp, meanp, varp = _bn4d_tiled(xp, gp, bp, tiny_cfg, max_tl=128, max_tc=8)
    yp = jax.block_until_ready(yp)
    mp_ref = jnp.mean(xp, axis=(0, 2)).reshape(Cp, 1)
    vp_ref = jnp.mean((xp - mp_ref[None, :, :]) ** 2, axis=(0, 2)).reshape(Cp, 1)
    yp_ref = (gp[None, :, :] * (xp - mp_ref[None, :, :])
              / jnp.sqrt(vp_ref[None, :, :] + EPS) + bp[None, :, :])
    assert yp.shape == xp.shape
    assert jnp.allclose(yp, yp_ref, **TOL)
    assert jnp.allclose(meanp, mp_ref, **TOL)
    assert jnp.allclose(varp, vp_ref, **TOL)

    # ---- 4D small-spatial case (L = 49 < 128 -> channels-on-lanes 2D path) --
    Nc, Cc, Hc, Wc = 2, 8, 7, 7
    xc = jax.random.normal(k4, (Nc, Cc, Hc, Wc), jnp.float32) - 0.4
    bnc = BatchNormPallas(num_features=Cc, num_dims=4)
    yc = jax.block_until_ready(bnc(xc))
    yc_ref, mmc_ref, mvc_ref = _reference_bn4d(
        xc, ones4(Cc), zeros4(Cc), zeros4(Cc), ones4(Cc), EPS, MOMENTUM)
    assert jnp.allclose(yc, yc_ref, **TOL)
    assert jnp.allclose(bnc.moving_mean, mmc_ref, **TOL)
    assert jnp.allclose(bnc.moving_var, mvc_ref, **TOL)

    # ---- 2D fully-connected case (module path, fused) -----------------------
    N3, C3 = 8, 32
    x3d = jax.random.normal(k5, (N3, C3), jnp.float32) + 1.0
    bn2 = BatchNormPallas(num_features=C3, num_dims=2)
    y3d = jax.block_until_ready(bn2(x3d))
    y3_ref, mm3_ref, mv3_ref = _reference_bn2d(
        x3d, jnp.ones((1, C3)), jnp.zeros((1, C3)),
        jnp.zeros((1, C3)), jnp.ones((1, C3)), EPS, MOMENTUM)
    assert jnp.allclose(y3d, y3_ref, **TOL)
    assert jnp.allclose(bn2.moving_mean, mm3_ref, **TOL)
    assert jnp.allclose(bn2.moving_var, mv3_ref, **TOL)

    # ---- 2D forced-tiled path (partial-sum stats, grid of 8 row blocks) -----
    N4, C4 = 64, 128
    x4 = jax.random.normal(k6, (N4, C4), jnp.float32) * 1.3 + 0.7
    g4 = jnp.full((1, C4), 1.1, jnp.float32)
    b4 = jnp.full((1, C4), 0.25, jnp.float32)
    y4, mean4, var4 = _bn2d_tiled(x4, g4, b4, tiny_cfg)
    y4 = jax.block_until_ready(y4)
    m4_ref = jnp.mean(x4, axis=0, keepdims=True)
    v4_ref = jnp.mean((x4 - m4_ref) ** 2, axis=0, keepdims=True)
    y4_ref = g4 * (x4 - m4_ref) / jnp.sqrt(v4_ref + EPS) + b4
    assert jnp.allclose(y4, y4_ref, **TOL)
    assert jnp.allclose(mean4, m4_ref, **TOL)
    assert jnp.allclose(var4, v4_ref, **TOL)

    print("KERNEL_OK")
</pallas_src>

<mosaic_0001>
module attributes {stable_mosaic.version = 11 : i64} {
  func.func @_bn4d_fused_kernel(%arg0: memref<2x4x256xf32, #tpu.memory_space<vmem>>, %arg1: memref<4x1xf32, #tpu.memory_space<vmem>>, %arg2: memref<4x1xf32, #tpu.memory_space<vmem>>, %arg3: memref<2x4x256xf32, #tpu.memory_space<vmem>>, %arg4: memref<4x1xf32, #tpu.memory_space<vmem>>, %arg5: memref<4x1xf32, #tpu.memory_space<vmem>>) attributes {dimension_semantics = [], scalar_prefetch = 0 : i64, scratch_operands = 0 : i64, tpu.core_type = #tpu.core_type<tc>} {
    %c0 = arith.constant 0 : index
    %c0_0 = arith.constant 0 : index
    %c0_1 = arith.constant 0 : index
    %0 = vector.load %arg0[%c0, %c0_0, %c0_1] : memref<2x4x256xf32, #tpu.memory_space<vmem>>, vector<2x4x256xf32>
    %cst = arith.constant dense<0.000000e+00> : vector<2x4xf32>
    %1 = vector.multi_reduction <add>, %0, %cst [2] : vector<2x4x256xf32> to vector<2x4xf32>
    %2 = vector.shape_cast %1 : vector<2x4xf32> to vector<2x4x1xf32>
    %cst_2 = arith.constant dense<0.000000e+00> : vector<4x1xf32>
    %3 = vector.multi_reduction <add>, %2, %cst_2 [0] : vector<2x4x1xf32> to vector<4x1xf32>
    %4 = arith.mulf %0, %0 : vector<2x4x256xf32>
    %cst_3 = arith.constant dense<0.000000e+00> : vector<2x4xf32>
    %5 = vector.multi_reduction <add>, %4, %cst_3 [2] : vector<2x4x256xf32> to vector<2x4xf32>
    %6 = vector.shape_cast %5 : vector<2x4xf32> to vector<2x4x1xf32>
    %cst_4 = arith.constant dense<0.000000e+00> : vector<4x1xf32>
    %7 = vector.multi_reduction <add>, %6, %cst_4 [0] : vector<2x4x1xf32> to vector<4x1xf32>
    %cst_5 = arith.constant 5.120000e+02 : f32
    %8 = vector.broadcast %cst_5 : f32 to vector<4x1xf32>
    %9 = arith.divf %3, %8 : vector<4x1xf32>
    %cst_6 = arith.constant 5.120000e+02 : f32
    %10 = vector.broadcast %cst_6 : f32 to vector<4x1xf32>
    %11 = arith.divf %7, %10 : vector<4x1xf32>
    %12 = arith.mulf %9, %9 : vector<4x1xf32>
    %13 = arith.subf %11, %12 : vector<4x1xf32>
    %cst_7 = arith.constant 0.000000e+00 : f32
    %14 = vector.broadcast %cst_7 : f32 to vector<4x1xf32>
    %15 = arith.maximumf %13, %14 : vector<4x1xf32>
    %cst_8 = arith.constant 9.99999974E-6 : f32
    %16 = vector.broadcast %cst_8 : f32 to vector<4x1xf32>
    %17 = arith.addf %15, %16 : vector<4x1xf32>
    %18 = math.rsqrt %17 : vector<4x1xf32>
    %c0_9 = arith.constant 0 : index
    %c0_10 = arith.constant 0 : index
    %19 = vector.load %arg1[%c0_9, %c0_10] : memref<4x1xf32, #tpu.memory_space<vmem>>, vector<4x1xf32>
    %20 = arith.mulf %19, %18 : vector<4x1xf32>
    %c0_11 = arith.constant 0 : index
    %c0_12 = arith.constant 0 : index
    %21 = vector.load %arg2[%c0_11, %c0_12] : memref<4x1xf32, #tpu.memory_space<vmem>>, vector<4x1xf32>
    %22 = arith.mulf %9, %20 : vector<4x1xf32>
    %23 = arith.subf %21, %22 : vector<4x1xf32>
    %24 = vector.shape_cast %20 : vector<4x1xf32> to vector<1x4x1xf32>
    %25 = vector.broadcast %24 : vector<1x4x1xf32> to vector<2x4x256xf32>
    %26 = arith.mulf %0, %25 : vector<2x4x256xf32>
    %27 = vector.shape_cast %23 : vector<4x1xf32> to vector<1x4x1xf32>
    %28 = vector.broadcast %27 : vector<1x4x1xf32> to vector<2x4x256xf32>
    %29 = arith.addf %26, %28 : vector<2x4x256xf32>
    %c0_13 = arith.constant 0 : index
    %c0_14 = arith.constant 0 : index
    %c0_15 = arith.constant 0 : index
    %30 = vector.load %arg3[%c0_13, %c0_14, %c0_15] : memref<2x4x256xf32, #tpu.memory_space<vmem>>, vector<2x4x256xf32>
    tpu.vector_store %arg3[%c0_13, %c0_14, %c0_15], %29 {strides = array<i32>} : memref<2x4x256xf32, #tpu.memory_space<vmem>>, vector<2x4x256xf32>,
    %c0_16 = arith.constant 0 : index
    %c0_17 = arith.constant 0 : index
    %31 = vector.load %arg4[%c0_16, %c0_17] : memref<4x1xf32, #tpu.memory_space<vmem>>, vector<4x1xf32>
    tpu.vector_store %arg4[%c0_16, %c0_17], %9 {strides = array<i32>} : memref<4x1xf32, #tpu.memory_space<vmem>>, vector<4x1xf32>,
    %c0_18 = arith.constant 0 : index
    %c0_19 = arith.constant 0 : index
    %32 = vector.load %arg5[%c0_18, %c0_19] : memref<4x1xf32, #tpu.memory_space<vmem>>, vector<4x1xf32>
    tpu.vector_store %arg5[%c0_18, %c0_19], %15 {strides = array<i32>} : memref<4x1xf32, #tpu.memory_space<vmem>>, vector<4x1xf32>,
    return
  }
}

</mosaic_0001>

<llo_original>
// kernel: tpu_custom_call.1
$region0: #{tpu_custom_call.1}
  #allocation0 [shape = 'u32[]', space=smem, size = 0x4, offset = 0x4, fixed_abs, tag = 'smem constant byte address 0x4 - core index']
  #allocation1 [shape = 'u32[72,128]{1,0:T(1,128)}', space=vmem, size = 0x9000, scoped, tag = 'internal scratch']
  %s0 = inlined_call_operand.hbm [shape: f32[2,4,256], index: 0, kind: input, shape index: {}]
  %s1 = inlined_call_operand.vmem [shape: f32[4,1], index: 1, kind: input, shape index: {}]
  %s2 = inlined_call_operand.vmem [shape: f32[4,1], index: 2, kind: input, shape index: {}]
  %s3 = inlined_call_operand.hbm [shape: f32[2,4,256], index: 3, kind: output, shape index: {0}]
  %s4 = inlined_call_operand.vmem [shape: f32[4,1], index: 4, kind: output, shape index: {1}]
  %s5 = inlined_call_operand.vmem [shape: f32[4,1], index: 5, kind: output, shape index: {2}]
  %6 = xla_tuple %s3, %s4, %s5
  %s7 = sld [smem:[#allocation0]]
  $region42: #{tpu_custom_call.1} parent=0
    _
  %s9 = ssub.s32 1, %s7
  %s10 = scalar_select 0, %s9, %s7
  $region1: #{tpu_custom_call.1} parent=0
    #allocation2 [shape = 'u8[8192]{0}', space=vmem, size = 0x2000, scoped, tag = 'input window, operand 0, single buffered']
    #allocation3 [shape = 's32[1]{0}', space=sflag, size = 0x4, scoped, tag = 'scoped memory for tpu_custom_call.1']
    #allocation4 [shape = 's32[1]{0}', space=sflag, size = 0x4, scoped, tag = 'scoped memory for tpu_custom_call.1']
    #allocation5 [shape = 'u8[8192]{0}', space=vmem, size = 0x2000, scoped, tag = 'output window, operand 0, single buffered']
    %11 = vsyncpa [#allocation3], 0
    %12 = vsyncpa [#allocation4], 0
    // Predicated region
    $region2: #{tpu_custom_call.1} parent=1 // pred_check
      _
    $region3: #{tpu_custom_call.1} parent=1 // pred_check_branch
      %14 = sbr.rel (0) target = $region5
    $region4: #{tpu_custom_call.1} parent=1 // pred_region
      %16 = vsyncadd [#allocation3], 0
      %s17 = sshll.u32 %s0, 4
      %s18 = int_to_ptr.hbm [resolvable:$true] %s17
      %s19 = sshll.u32 [#allocation2], 4
      %s20 = int_to_ptr.vmem [resolvable:$true] %s19
      %25 = dma.hbm_to_vmem [thread:$0]  %s18, 256, %s20, [#allocation3], 128, 128, 8
    $region5: #{tpu_custom_call.1} parent=1 // pred_fallthru
      _
    // Predicated region
    $region6: #{tpu_custom_call.1} parent=1 // pred_check
      _
    $region7: #{tpu_custom_call.1} parent=1 // pred_check_branch
      %27 = sbr.rel (0) target = $region9
    $region8: #{tpu_custom_call.1} parent=1 // pred_region
      _
    $region9: #{tpu_custom_call.1} parent=1 // pred_fallthru
      _
    // Predicated region
    $region10: #{tpu_custom_call.1} parent=1 // pred_check
      _
    $region11: #{tpu_custom_call.1} parent=1 // pred_check_branch
      %29 = sbr.rel (0) target = $region13
    $region12: #{tpu_custom_call.1} parent=1 // pred_region
      _
    $region13: #{tpu_custom_call.1} parent=1 // pred_fallthru
      _
    // Predicated region
    $region14: #{tpu_custom_call.1} parent=1 // pred_check
      _
    $region15: #{tpu_custom_call.1} parent=1 // pred_check_branch
      %31 = sbr.rel (0) target = $region17
    $region16: #{tpu_custom_call.1} parent=1 // pred_region
      %33 = dma.done [#allocation3], 256
    $region17: #{tpu_custom_call.1} parent=1 // pred_fallthru
      _
    %v34 = vld [vmem:[#allocation2] sm:$0xff]
    %v35 = vld [vmem:[#allocation2 + $0x8] sm:$0xff]
    %38 = vst [vmem:[#allocation1] ss:$2 sm:$0xff] %v34
    %v39 = vld.sshfl [vmem:[#allocation1] sm:$0xff pattern:$0x75316420]
    %v40 = vld.sshfl [vmem:[#allocation1 + $0x8] sm:$0xff pattern:$0x75316420]
    %s41 = scalar_lea.vmem [#allocation1], 16
    %42 = vst [vmem:[%s41] ss:$2 sm:$0xff] %v35
    %v43 = vld.sshfl [vmem:[#allocation1 + $0x10] sm:$0xff pattern:$0x75316420]
    %v44 = vld.sshfl [vmem:[#allocation1 + $0x18] sm:$0xff pattern:$0x75316420]
    %vm49 = vcmask 1043456
    %v50 = vsel %vm49, %v39, 0.0
    %v51 = vsel %vm49, %v40, 0.0
    %v52 = vadd.f32 %v50, %v51
    %53 = vadd.xlane.f32.xlu0 %v52
    %v54 = vpop.xlane.xlu0 %53
    %v55 = vsel %vm49, %v43, 0.0
    %v56 = vsel %vm49, %v44, 0.0
    %v57 = vadd.f32 %v55, %v56
    %58 = vadd.xlane.f32.xlu0 %v57
    %v59 = vpop.xlane.xlu0 %58
    %v60 = vsel %vm49, %v54, 0.0
    %v61 = vsel %vm49, %v59, 0.0
    %v62 = vadd.f32 %v60, %v61
    %v63 = vmul.f32 %v34, %v34
    %v64 = vmul.f32 %v35, %v35
    %67 = vst [vmem:[#allocation1] ss:$2 sm:$0xff] %v63
    %v68 = vld.sshfl [vmem:[#allocation1] sm:$0xff pattern:$0x75316420]
    %v69 = vld.sshfl [vmem:[#allocation1 + $0x8] sm:$0xff pattern:$0x75316420]
    %s70 = scalar_lea.vmem [#allocation1], 16
    %71 = vst [vmem:[%s70] ss:$2 sm:$0xff] %v64
    %v72 = vld.sshfl [vmem:[#allocation1 + $0x10] sm:$0xff pattern:$0x75316420]
    %v73 = vld.sshfl [vmem:[#allocation1 + $0x18] sm:$0xff pattern:$0x75316420]
    %v78 = vsel %vm49, %v68, 0.0
    %v79 = vsel %vm49, %v69, 0.0
    %v80 = vadd.f32 %v78, %v79
    %81 = vadd.xlane.f32.xlu0 %v80
    %v82 = vpop.xlane.xlu0 %81
    %v83 = vsel %vm49, %v72, 0.0
    %v84 = vsel %vm49, %v73, 0.0
    %v85 = vadd.f32 %v83, %v84
    %86 = vadd.xlane.f32.xlu0 %v85
    %v87 = vpop.xlane.xlu0 %86
    %v88 = vsel %vm49, %v82, 0.0
    %v89 = vsel %vm49, %v87, 0.0
    %v90 = vadd.f32 %v88, %v89
    %v91 = vrcp.pop 512.0
    %v92 = vmul.f32 512.0, %v91
    %v93 = vsub.f32 1.0, %v92
    %v94 = vmul.f32 %v91, %v93
    %v95 = vadd.f32 %v91, %v94
    %vm96 = vweird.f32 %v91
    %v97 = vsel %vm96, %v91, %v95
    %v98 = vmul.f32 %v62, %v97
    %v99 = vmul.f32 %v90, %v97
    %v100 = vmul.f32 %v98, %v98
    %v101 = vsub.f32 %v99, %v100
    %v102 = vmax.f32 %v101, 0.0
    %v103 = vadd.f32 %v102, 1e-05
    %v104 = vrsqrt.pop %v103
    %v105 = vmul.f32 %v104, %v103
    %v106 = vmul.f32 %v105, %v104
    %v107 = vmul.f32 0.5, %v106
    %v108 = vsub.f32 1.5, %v107
    %v109 = vmul.f32 %v104, %v108
    %vm110 = vweird.f32 %v103
    %vm111 = vweird.f32 %v104
    %vm112 = vmor %vm110, %vm111
    %v113 = vsel %vm112, %v104, %v109
    %v114 = vld [vmem:[%s1] sm:$0xf]
    %v115 = vmul.f32 %v114, %v113
    %v116 = vld [vmem:[%s2] sm:$0xf]
    %v117 = vmul.f32 %v98, %v115
    %v118 = vsub.f32 %v116, %v117
    %120 = vset.pattern.permute.xlu0 0
    %121 = vperm.xlu0 %120, %v115
    %v122 = vpop.permute.xlu0 %121
    %v124 = vunpack.c.l.s4 839922192
    %v125 = vunpack.c.0.s8 %v124
    %v126 = vperm.slane %v122, %v125
    %v128 = vmul.f32 %v34, %v126
    %v129 = vmul.f32 %v35, %v126
    %131 = vset.pattern.permute.xlu0 0
    %132 = vperm.xlu0 %131, %v118
    %v133 = vpop.permute.xlu0 %132
    %v135 = vunpack.c.l.s4 839922192
    %v136 = vunpack.c.0.s8 %v135
    %v137 = vperm.slane %v133, %v136
    %v139 = vadd.f32 %v128, %v137
    %v140 = vadd.f32 %v129, %v137
    %141 = vst [vmem:[#allocation5] sm:$0xff] %v139
    %142 = vst [vmem:[#allocation5 + $0x8] sm:$0xff] %v140
    %vm143 = vcmask 3072
    %144 = vst.msk [vmem:[%s4] sm:$0xf] %vm143, %v98
    %145 = vst.msk [vmem:[%s5] sm:$0xf] %vm143, %v102
    // Predicated region
    $region18: #{tpu_custom_call.1} parent=1 // pred_check
      _
    $region19: #{tpu_custom_call.1} parent=1 // pred_check_branch
      %147 = sbr.rel (0) target = $region21
    $region20: #{tpu_custom_call.1} parent=1 // pred_region
      %149 = vsyncadd [#allocation4], 0
      %s150 = sshll.u32 [#allocation5], 4
      %s151 = int_to_ptr.vmem [resolvable:$true] %s150
      %s152 = sshll.u32 %s3, 4
      %s153 = int_to_ptr.hbm [resolvable:$true] %s152
      %158 = dma.vmem_to_hbm [thread:$0]  %s151, 256, %s153, [#allocation4], 128, 128, 8
    $region21: #{tpu_custom_call.1} parent=1 // pred_fallthru
      _
    // Predicated region
    $region22: #{tpu_custom_call.1} parent=1 // pred_check
      _
    $region23: #{tpu_custom_call.1} parent=1 // pred_check_branch
      %160 = sbr.rel (0) target = $region25
    $region24: #{tpu_custom_call.1} parent=1 // pred_region
      _
    $region25: #{tpu_custom_call.1} parent=1 // pred_fallthru
      _
    // Predicated region
    $region26: #{tpu_custom_call.1} parent=1 // pred_check
      _
    $region27: #{tpu_custom_call.1} parent=1 // pred_check_branch
      %162 = sbr.rel (0) target = $region29
    $region28: #{tpu_custom_call.1} parent=1 // pred_region
      _
    $region29: #{tpu_custom_call.1} parent=1 // pred_fallthru
      _
    // Predicated region
    $region30: #{tpu_custom_call.1} parent=1 // pred_check
      _
    $region31: #{tpu_custom_call.1} parent=1 // pred_check_branch
      %164 = sbr.rel (0) target = $region33
    $region32: #{tpu_custom_call.1} parent=1 // pred_region
      %166 = dma.done [#allocation4], 256
    $region33: #{tpu_custom_call.1} parent=1 // pred_fallthru
      _
    // Predicated region
    $region34: #{tpu_custom_call.1} parent=1 // pred_check
      _
    $region35: #{tpu_custom_call.1} parent=1 // pred_check_branch
      %168 = sbr.rel (0) target = $region37
    $region36: #{tpu_custom_call.1} parent=1 // pred_region
      _
    $region37: #{tpu_custom_call.1} parent=1 // pred_fallthru
      _
    // Predicated region
    $region38: #{tpu_custom_call.1} parent=1 // pred_check
      _
    $region39: #{tpu_custom_call.1} parent=1 // pred_check_branch
      %170 = sbr.rel (0) target = $region41
    $region40: #{tpu_custom_call.1} parent=1 // pred_region
      _
    $region41: #{tpu_custom_call.1} parent=1 // pred_fallthru
      _
    %171 = vsyncpa [#allocation3], 1
    %172 = vsyncpa [#allocation4], 1

</llo_original>
